<compile_context>
chip_gen: v5e
topology: v5e:2x2
jax: 0.10.0
libtpu: 0.0.40
codegen_flags: <defaults>
</compile_context>

<pallas_src>
import math

import jax
import jax.numpy as jnp
from jax import lax
from jax.experimental import pallas as pl
from jax.experimental.pallas import tpu as pltpu

HIDDEN = 125          # logical hidden width (as in the PyTorch module)
HIDDEN_PAD = 128      # lane/sublane-aligned padded hidden width
IN_FEATURES = 1
OUT_FEATURES = 1
MAX_TILE_B = 2048     # rows per grid step for large batches
SUB_B = 256           # rows (lanes) per inner sub-block


def _elementwise_dtype():
    """bf16 epilogues on chips with a bf16 VALU (v6e / v7x); f32 elsewhere (v5e, v4...)."""
    try:
        kind = jax.devices()[0].device_kind.lower()
    except Exception:
        return jnp.float32
    if any(tag in kind for tag in ("v6", "v7", "7x")):
        return jnp.bfloat16
    return jnp.float32


def _make_kernel(n_sub, ew_dtype):
    """Fused 4-layer MLP over one (1, n_sub, sub_b) batch tile, batch on the lane axis."""

    def kernel(x_ref, p1_ref, w23_ref, w4_ref, b4_ref, o_ref):
        # Small per-feature parameters: cast once, outside the sub-block loop.
        w1 = p1_ref[0].astype(ew_dtype)      # (128, 1)  fc1 weight column
        b1 = p1_ref[1].astype(ew_dtype)      # (128, 1)
        b2 = p1_ref[2].astype(ew_dtype)      # (128, 1)
        b3 = p1_ref[3].astype(ew_dtype)      # (128, 1)
        w2 = w23_ref[0]                      # (128, 128) bf16, torch (out, in) orientation
        w3 = w23_ref[1]                      # (128, 128) bf16
        w4 = w4_ref[...]                     # (1, 128)   bf16
        b4 = b4_ref[0, 0]                    # f32 scalar from SMEM

        def body(s, carry):
            # (1, sub_b) lane-dense slice of the batch.
            xs = x_ref[0, pl.ds(s, 1), :].astype(ew_dtype)

            # Layer 1: K=1 contraction == outer product -> pure VPU broadcast (no MXU).
            h = jnp.maximum(w1 * xs + b1, 0.0)                       # (128, sub_b)

            # Layers 2 & 3: real matmuls on the MXU, bf16 operands, f32 accumulation.
            h = jnp.dot(w2, h.astype(jnp.bfloat16),
                        preferred_element_type=jnp.float32)          # (128, sub_b) f32
            h = jnp.maximum(h.astype(ew_dtype) + b2, 0.0)
            h = jnp.dot(w3, h.astype(jnp.bfloat16),
                        preferred_element_type=jnp.float32)
            h = jnp.maximum(h.astype(ew_dtype) + b3, 0.0)

            # Layer 4: M=1 matmul -> lane-dense (1, sub_b) row straight from the MXU.
            y = jnp.dot(w4, h.astype(jnp.bfloat16),
                        preferred_element_type=jnp.float32) + b4     # (1, sub_b) f32

            o_ref[0, pl.ds(s, 1), :] = y.astype(o_ref.dtype)
            return carry

        lax.fori_loop(0, n_sub, body, 0, unroll=True)

    return kernel


def _choose_tiling(batch, max_tile=MAX_TILE_B):
    """Pick (tile_b, sub_b, n_tiles, b_pad) with minimal padding and few grid steps."""
    b128 = max(128, ((batch + 127) // 128) * 128)
    if b128 <= max_tile:
        tile_b = b128                                 # single grid step for small/medium B
    else:
        tile_b = max_tile
        best_pad = -(-batch // tile_b) * tile_b
        for t in (1024, 512):                         # shrink only if it cuts padded work
            p = -(-batch // t) * t
            if p < best_pad:
                tile_b, best_pad = t, p
    sub_b = SUB_B if tile_b % SUB_B == 0 else 128
    n_tiles = -(-batch // tile_b)
    b_pad = n_tiles * tile_b
    return tile_b, sub_b, n_tiles, b_pad


def net1_forward(x, params):
    """x: (B, 1) float32 -> (B, 1) float32."""
    B = x.shape[0]
    ew_dtype = _elementwise_dtype()
    tile_b, sub_b, n_tiles, b_pad = _choose_tiling(B)
    n_sub = tile_b // sub_b

    xf = x.reshape(B).astype(jnp.float32)
    if b_pad != B:
        xf = jnp.pad(xf, (0, b_pad - B))              # padded tail rows are sliced off below
    x3 = xf.reshape(n_tiles, n_sub, sub_b)            # batch on the lane axis

    flops = 4 * HIDDEN_PAD * HIDDEN_PAD * b_pad
    bytes_accessed = (8 * b_pad                                   # x in + y out (f32)
                      + 2 * HIDDEN_PAD * HIDDEN_PAD * 2           # w2/w3 bf16
                      + 4 * HIDDEN_PAD * 4 + 2 * HIDDEN_PAD + 4)  # p1, w4, b4

    out = pl.pallas_call(
        _make_kernel(n_sub, ew_dtype),
        out_shape=jax.ShapeDtypeStruct((n_tiles, n_sub, sub_b), jnp.float32),
        grid=(n_tiles,),
        in_specs=[
            pl.BlockSpec((1, n_sub, sub_b), lambda i: (i, 0, 0)),            # x tile
            pl.BlockSpec((4, HIDDEN_PAD, 1), lambda i: (0, 0, 0)),           # w1,b1,b2,b3 (resident)
            pl.BlockSpec((2, HIDDEN_PAD, HIDDEN_PAD), lambda i: (0, 0, 0)),  # w2,w3 (resident)
            pl.BlockSpec((1, HIDDEN_PAD), lambda i: (0, 0)),                 # w4 row (resident)
            pl.BlockSpec(memory_space=pltpu.MemorySpace.SMEM),               # b4 scalar
        ],
        out_specs=pl.BlockSpec((1, n_sub, sub_b), lambda i: (i, 0, 0)),      # lane-dense output
        compiler_params=pltpu.CompilerParams(
            dimension_semantics=("parallel",)),
        cost_estimate=pl.CostEstimate(flops=flops, transcendentals=0,
                                      bytes_accessed=bytes_accessed),
    )(x3, params["p1"], params["w23"], params["w4r"], params["b4"])

    return out.reshape(b_pad, 1)[:B]


def init_params(key):
    """Init matching Net1.__init__: weights ~ U(-0.5, 0.5) (torch (out, in) orientation);
       biases ~ U(-1/sqrt(fan_in), 1/sqrt(fan_in)) (nn.Linear default).
       Hidden width 125 is zero-padded to 128; padding is inert through ReLU / zero weights."""
    ks = jax.random.split(key, 8)

    def w(k, out_f, in_f):
        return jax.random.uniform(k, (out_f, in_f), jnp.float32, -0.5, 0.5)

    def b(k, fan_in, out_f):
        bound = 1.0 / math.sqrt(fan_in)
        return jax.random.uniform(k, (out_f,), jnp.float32, -bound, bound)

    w1 = w(ks[0], HIDDEN, IN_FEATURES);  b1 = b(ks[1], IN_FEATURES, HIDDEN)
    w2 = w(ks[2], HIDDEN, HIDDEN);       b2 = b(ks[3], HIDDEN, HIDDEN)
    w3 = w(ks[4], HIDDEN, HIDDEN);       b3 = b(ks[5], HIDDEN, HIDDEN)
    w4 = w(ks[6], OUT_FEATURES, HIDDEN); b4 = b(ks[7], HIDDEN, OUT_FEATURES)

    ph = HIDDEN_PAD - HIDDEN

    def col(v):  # (HIDDEN,) -> (HIDDEN_PAD, 1) padded column
        return jnp.pad(v, (0, ph)).reshape(HIDDEN_PAD, 1)

    params = {
        # [w1 | b1 | b2 | b3] as feature columns, f32 (cast to the elementwise dtype in-kernel)
        "p1": jnp.stack([jnp.pad(w1, ((0, ph), (0, 0))), col(b1), col(b2), col(b3)]),
        # w2, w3 in torch (out, in) orientation, zero-padded, bf16 for the MXU
        "w23": jnp.stack([jnp.pad(w2, ((0, ph), (0, ph))),
                          jnp.pad(w3, ((0, ph), (0, ph)))]).astype(jnp.bfloat16),
        "w4r": jnp.pad(w4, ((0, 0), (0, ph))).astype(jnp.bfloat16),   # (1, 128) bf16
        "b4": b4.reshape(1, 1),                                       # (1, 1) f32 -> SMEM
    }
    ref = {"w1": w1, "b1": b1, "w2": w2, "b2": b2,
           "w3": w3, "b3": b3, "w4": w4, "b4": b4}
    return params, ref


def reference_f32(x, ref):
    """Pure-f32 reference matching the PyTorch forward exactly."""
    h = jnp.maximum(x @ ref["w1"].T + ref["b1"], 0.0)
    h = jnp.maximum(h @ ref["w2"].T + ref["b2"], 0.0)
    h = jnp.maximum(h @ ref["w3"].T + ref["b3"], 0.0)
    return h @ ref["w4"].T + ref["b4"]


def reference_matched(x, ref, ew_dtype):
    """Reference mirroring the kernel's dtype policy (ew-dtype epilogues, bf16 MXU operands,
       f32 accumulation)."""
    bf = jnp.bfloat16
    h = jnp.maximum(x.astype(ew_dtype) * ref["w1"].T.astype(ew_dtype)
                    + ref["b1"].astype(ew_dtype), 0.0)
    h = jnp.dot(h.astype(bf), ref["w2"].T.astype(bf), preferred_element_type=jnp.float32)
    h = jnp.maximum(h.astype(ew_dtype) + ref["b2"].astype(ew_dtype), 0.0)
    h = jnp.dot(h.astype(bf), ref["w3"].T.astype(bf), preferred_element_type=jnp.float32)
    h = jnp.maximum(h.astype(ew_dtype) + ref["b3"].astype(ew_dtype), 0.0)
    y = jnp.dot(h.astype(bf), ref["w4"].T.astype(bf), preferred_element_type=jnp.float32)
    return y + ref["b4"]


if __name__ == "__main__":
    key = jax.random.PRNGKey(0)
    k_param, k_x = jax.random.split(key)
    params, ref = init_params(k_param)
    ew_dtype = _elementwise_dtype()

    # B=20   -> single tile, single sub-block (sub_b=128)
    # B=300  -> single tile (tile_b=384), three 128-wide sub-blocks
    # B=2500 -> multi-tile grid (tile_b=512, 5 steps), two 256-wide sub-blocks per step
    for B in (20, 300, 2500):
        x = jax.random.normal(jax.random.fold_in(k_x, B), (B, IN_FEATURES), jnp.float32)
        out = jax.block_until_ready(net1_forward(x, params))
        assert out.shape == (B, OUT_FEATURES)

        # Check vs a reference using the same dtype policy as the kernel (tolerances allow
        # for rounding-order differences between fused VPU/MXU ops and the XLA reference).
        exp_m = reference_matched(x, ref, ew_dtype)
        assert jnp.allclose(out, exp_m, atol=2e-1, rtol=5e-2), \
            (B, float(jnp.max(jnp.abs(out - exp_m))))

        # Loose check vs pure-f32 PyTorch semantics (bf16 quantization of the hidden
        # matmul operands / epilogues is the only deviation).
        exp_f = reference_f32(x, ref)
        assert jnp.allclose(out, exp_f, atol=1.5, rtol=1e-1), \
            (B, float(jnp.max(jnp.abs(out - exp_f))))

    print("KERNEL_OK")
</pallas_src>

<mosaic_0001>
module attributes {stable_mosaic.version = 11 : i64} {
  func.func @kernel(%arg0: i32, %arg1: memref<1x1x128xf32, #tpu.memory_space<vmem>>, %arg2: memref<4x128x1xf32, #tpu.memory_space<vmem>>, %arg3: memref<2x128x128xbf16, #tpu.memory_space<vmem>>, %arg4: memref<1x128xbf16, #tpu.memory_space<vmem>>, %arg5: memref<1x1xf32, #tpu.memory_space<smem>>, %arg6: memref<1x1x128xf32, #tpu.memory_space<vmem>>) attributes {dimension_semantics = [#tpu.dimension_semantics<parallel>], iteration_bounds = array<i64: 1>, scalar_prefetch = 0 : i64, scratch_operands = 0 : i64, tpu.core_type = #tpu.core_type<tc>, window_params = [{transform_indices = @transform_0, window_bounds = array<i64: 1, 1, 128>}, {pipeline_mode = #tpu.pipeline_mode<synchronous>, transform_indices = @transform_1, window_bounds = array<i64: 4, 128, 1>}, {pipeline_mode = #tpu.pipeline_mode<synchronous>, transform_indices = @transform_2, window_bounds = array<i64: 2, 128, 128>}, {pipeline_mode = #tpu.pipeline_mode<synchronous>, transform_indices = @transform_3, window_bounds = array<i64: 1, 128>}, {transform_indices = @transform_4, window_bounds = array<i64: 1, 1>}, {transform_indices = @transform_5, window_bounds = array<i64: 1, 1, 128>}]} {
    %c0 = arith.constant 0 : index
    %c0_0 = arith.constant 0 : index
    %c0_1 = arith.constant 0 : index
    %0 = vector.load %arg2[%c0, %c0_0, %c0_1] : memref<4x128x1xf32, #tpu.memory_space<vmem>>, vector<1x128x1xf32>
    %1 = vector.shape_cast %0 : vector<1x128x1xf32> to vector<128x1xf32>
    %c1 = arith.constant 1 : index
    %c0_2 = arith.constant 0 : index
    %c0_3 = arith.constant 0 : index
    %2 = vector.load %arg2[%c1, %c0_2, %c0_3] : memref<4x128x1xf32, #tpu.memory_space<vmem>>, vector<1x128x1xf32>
    %3 = vector.shape_cast %2 : vector<1x128x1xf32> to vector<128x1xf32>
    %c2 = arith.constant 2 : index
    %c0_4 = arith.constant 0 : index
    %c0_5 = arith.constant 0 : index
    %4 = vector.load %arg2[%c2, %c0_4, %c0_5] : memref<4x128x1xf32, #tpu.memory_space<vmem>>, vector<1x128x1xf32>
    %5 = vector.shape_cast %4 : vector<1x128x1xf32> to vector<128x1xf32>
    %c3 = arith.constant 3 : index
    %c0_6 = arith.constant 0 : index
    %c0_7 = arith.constant 0 : index
    %6 = vector.load %arg2[%c3, %c0_6, %c0_7] : memref<4x128x1xf32, #tpu.memory_space<vmem>>, vector<1x128x1xf32>
    %7 = vector.shape_cast %6 : vector<1x128x1xf32> to vector<128x1xf32>
    %c0_8 = arith.constant 0 : index
    %c0_9 = arith.constant 0 : index
    %c0_10 = arith.constant 0 : index
    %8 = vector.load %arg3[%c0_8, %c0_9, %c0_10] : memref<2x128x128xbf16, #tpu.memory_space<vmem>>, vector<1x128x128xbf16>
    %9 = vector.shape_cast %8 : vector<1x128x128xbf16> to vector<128x128xbf16>
    %c1_11 = arith.constant 1 : index
    %c0_12 = arith.constant 0 : index
    %c0_13 = arith.constant 0 : index
    %10 = vector.load %arg3[%c1_11, %c0_12, %c0_13] : memref<2x128x128xbf16, #tpu.memory_space<vmem>>, vector<1x128x128xbf16>
    %11 = vector.shape_cast %10 : vector<1x128x128xbf16> to vector<128x128xbf16>
    %c0_14 = arith.constant 0 : index
    %c0_15 = arith.constant 0 : index
    %12 = vector.load %arg4[%c0_14, %c0_15] : memref<1x128xbf16, #tpu.memory_space<vmem>>, vector<1x128xbf16>
    %c0_16 = arith.constant 0 : index
    %c0_17 = arith.constant 0 : index
    %13 = memref.load %arg5[%c0_16, %c0_17] : memref<1x1xf32, #tpu.memory_space<smem>>
    %c0_i32 = arith.constant 0 : i32
    %c0_18 = arith.constant 0 : index
    %14 = arith.index_cast %c0_i32 : i32 to index
    %c0_19 = arith.constant 0 : index
    %15 = vector.load %arg1[%c0_18, %14, %c0_19] : memref<1x1x128xf32, #tpu.memory_space<vmem>>, vector<1x1x128xf32>
    %16 = vector.shape_cast %15 : vector<1x1x128xf32> to vector<1x128xf32>
    %17 = vector.broadcast %1 : vector<128x1xf32> to vector<128x128xf32>
    %18 = vector.broadcast %16 : vector<1x128xf32> to vector<128x128xf32>
    %19 = arith.mulf %17, %18 : vector<128x128xf32>
    %20 = vector.broadcast %3 : vector<128x1xf32> to vector<128x128xf32>
    %21 = arith.addf %19, %20 : vector<128x128xf32>
    %cst = arith.constant 0.000000e+00 : f32
    %22 = vector.broadcast %cst : f32 to vector<128x128xf32>
    %23 = arith.maximumf %21, %22 : vector<128x128xf32>
    %24 = arith.truncf %23 : vector<128x128xf32> to vector<128x128xbf16>
    %cst_20 = arith.constant dense<0.000000e+00> : vector<128x128xf32>
    %25 = tpu.matmul %9, %24, %cst_20 {dimension_numbers = #tpu.dot_dimension_numbers<[1], [0], [0], [1], [0, 0, 1, 1], [], []>} : vector<128x128xbf16>, vector<128x128xbf16>, vector<128x128xf32> -> vector<128x128xf32>
    %26 = vector.broadcast %5 : vector<128x1xf32> to vector<128x128xf32>
    %27 = arith.addf %25, %26 : vector<128x128xf32>
    %cst_21 = arith.constant 0.000000e+00 : f32
    %28 = vector.broadcast %cst_21 : f32 to vector<128x128xf32>
    %29 = arith.maximumf %27, %28 : vector<128x128xf32>
    %30 = arith.truncf %29 : vector<128x128xf32> to vector<128x128xbf16>
    %cst_22 = arith.constant dense<0.000000e+00> : vector<128x128xf32>
    %31 = tpu.matmul %11, %30, %cst_22 {dimension_numbers = #tpu.dot_dimension_numbers<[1], [0], [0], [1], [0, 0, 1, 1], [], []>} : vector<128x128xbf16>, vector<128x128xbf16>, vector<128x128xf32> -> vector<128x128xf32>
    %32 = vector.broadcast %7 : vector<128x1xf32> to vector<128x128xf32>
    %33 = arith.addf %31, %32 : vector<128x128xf32>
    %cst_23 = arith.constant 0.000000e+00 : f32
    %34 = vector.broadcast %cst_23 : f32 to vector<128x128xf32>
    %35 = arith.maximumf %33, %34 : vector<128x128xf32>
    %36 = arith.truncf %35 : vector<128x128xf32> to vector<128x128xbf16>
    %cst_24 = arith.constant dense<0.000000e+00> : vector<1x128xf32>
    %37 = tpu.matmul %12, %36, %cst_24 {dimension_numbers = #tpu.dot_dimension_numbers<[1], [0], [0], [1], [0, 0, 1, 1], [], []>} : vector<1x128xbf16>, vector<128x128xbf16>, vector<1x128xf32> -> vector<1x128xf32>
    %38 = vector.broadcast %13 : f32 to vector<1x128xf32>
    %39 = arith.addf %37, %38 : vector<1x128xf32>
    %c0_25 = arith.constant 0 : index
    %40 = arith.index_cast %c0_i32 : i32 to index
    %c0_26 = arith.constant 0 : index
    %41 = vector.load %arg6[%c0_25, %40, %c0_26] : memref<1x1x128xf32, #tpu.memory_space<vmem>>, vector<1x1x128xf32>
    %42 = vector.shape_cast %41 : vector<1x1x128xf32> to vector<1x128xf32>
    %43 = vector.shape_cast %39 : vector<1x128xf32> to vector<1x1x128xf32>
    tpu.vector_store %arg6[%c0_25, %40, %c0_26], %43 {strides = array<i32>} : memref<1x1x128xf32, #tpu.memory_space<vmem>>, vector<1x1x128xf32>,
    %c1_i32 = arith.constant 1 : i32
    return
  }
  func.func @transform_0(%arg0: i32) -> (i32, i32, i32) {
    %c0_i32 = arith.constant 0 : i32
    %c0_i32_0 = arith.constant 0 : i32
    %c0_i32_1 = arith.constant 0 : i32
    return %arg0, %c0_i32, %c0_i32_0 : i32, i32, i32
  }
  func.func @transform_1(%arg0: i32) -> (i32, i32, i32) {
    %c0_i32 = arith.constant 0 : i32
    %c0_i32_0 = arith.constant 0 : i32
    %c0_i32_1 = arith.constant 0 : i32
    %c0_i32_2 = arith.constant 0 : i32
    return %c0_i32, %c0_i32_0, %c0_i32_1 : i32, i32, i32
  }
  func.func @transform_2(%arg0: i32) -> (i32, i32, i32) {
    %c0_i32 = arith.constant 0 : i32
    %c0_i32_0 = arith.constant 0 : i32
    %c0_i32_1 = arith.constant 0 : i32
    %c0_i32_2 = arith.constant 0 : i32
    return %c0_i32, %c0_i32_0, %c0_i32_1 : i32, i32, i32
  }
  func.func @transform_3(%arg0: i32) -> (i32, i32) {
    %c0_i32 = arith.constant 0 : i32
    %c0_i32_0 = arith.constant 0 : i32
    %c0_i32_1 = arith.constant 0 : i32
    return %c0_i32, %c0_i32_0 : i32, i32
  }
  func.func @transform_4(%arg0: i32) -> (i32, i32) {
    %c0_i32 = arith.constant 0 : i32
    %c0_i32_0 = arith.constant 0 : i32
    %c0_i32_1 = arith.constant 0 : i32
    return %c0_i32, %c0_i32_0 : i32, i32
  }
  func.func @transform_5(%arg0: i32) -> (i32, i32, i32) {
    %c0_i32 = arith.constant 0 : i32
    %c0_i32_0 = arith.constant 0 : i32
    %c0_i32_1 = arith.constant 0 : i32
    return %arg0, %c0_i32, %c0_i32_0 : i32, i32, i32
  }
}

</mosaic_0001>

<llo_original>
// kernel: tpu_custom_call.1
$region0: #{tpu_custom_call.1}
  #allocation0 [shape = 'u32[]', space=smem, size = 0x4, offset = 0x4, fixed_abs, tag = 'smem constant byte address 0x4 - core index']
  #allocation1 [shape = 'u32[72,128]{1,0:T(1,128)}', space=vmem, size = 0x9000, scoped, tag = 'internal scratch']
  #allocation2 [shape = 'f32[1,1]{1,0:T(1,128)S(6)}', space=smem, size = 0x200, scoped, tag = 'scoped memory for tpu_custom_call.1']
  %s0 = inlined_call_operand.vmem [shape: f32[1,1,128], index: 0, kind: input, shape index: {}]
  %s1 = inlined_call_operand.vmem [shape: f32[4,128,1], index: 1, kind: input, shape index: {}]
  %s2 = inlined_call_operand.vmem [shape: bf16[2,128,128], index: 2, kind: input, shape index: {}]
  %s3 = inlined_call_operand.vmem [shape: bf16[1,128], index: 3, kind: input, shape index: {}]
  %s4 = inlined_call_operand.<no memory space> [shape: f32[1,1], index: 4, kind: input, shape index: {}]
  %s5 = inlined_call_operand.hbm [shape: f32[1,1,128], index: 5, kind: output, shape index: {}]
  %s6 = sld [smem:[#allocation0]]
  $region30: #{tpu_custom_call.1} parent=0
    _
  %s8 = ssub.s32 1, %s6
  %s9 = scalar_select 0, %s8, %s6
  %10 = sst [smem:[#allocation2]] %s4
  $region1: #{tpu_custom_call.1} parent=0
    #allocation3 [shape = 'u8[512]{0}', space=vmem, size = 0x400, scoped, tag = 'output window, operand 0, single buffered']
    #allocation4 [shape = 's32[1]{0}', space=sflag, size = 0x4, scoped, tag = 'scoped memory for tpu_custom_call.1']
    %11 = vsyncpa [#allocation4], 0
    // Predicated region
    $region2: #{tpu_custom_call.1} parent=1 // pred_check
      _
    $region3: #{tpu_custom_call.1} parent=1 // pred_check_branch
      %13 = sbr.rel (0) target = $region5
    $region4: #{tpu_custom_call.1} parent=1 // pred_region
      _
    $region5: #{tpu_custom_call.1} parent=1 // pred_fallthru
      _
    // Predicated region
    $region6: #{tpu_custom_call.1} parent=1 // pred_check
      _
    $region7: #{tpu_custom_call.1} parent=1 // pred_check_branch
      %15 = sbr.rel (0) target = $region9
    $region8: #{tpu_custom_call.1} parent=1 // pred_region
      _
    $region9: #{tpu_custom_call.1} parent=1 // pred_fallthru
      _
    // Predicated region
    $region10: #{tpu_custom_call.1} parent=1 // pred_check
      _
    $region11: #{tpu_custom_call.1} parent=1 // pred_check_branch
      %17 = sbr.rel (0) target = $region13
    $region12: #{tpu_custom_call.1} parent=1 // pred_region
      _
    $region13: #{tpu_custom_call.1} parent=1 // pred_fallthru
      _
    // Predicated region
    $region14: #{tpu_custom_call.1} parent=1 // pred_check
      _
    $region15: #{tpu_custom_call.1} parent=1 // pred_check_branch
      %19 = sbr.rel (0) target = $region17
    $region16: #{tpu_custom_call.1} parent=1 // pred_region
      _
    $region17: #{tpu_custom_call.1} parent=1 // pred_fallthru
      _
    // Predicated region
    $region18: #{tpu_custom_call.1} parent=1 // pred_check
      _
    $region19: #{tpu_custom_call.1} parent=1 // pred_check_branch
      %21 = sbr.rel (0) target = $region21
    $region20: #{tpu_custom_call.1} parent=1 // pred_region
      _
    $region21: #{tpu_custom_call.1} parent=1 // pred_fallthru
      _
    %v22 = vld [vmem:[%s1] sm:$0xff]
    %v23 = vld [vmem:[%s1 + $0x8] sm:$0xff]
    %v24 = vld [vmem:[%s1 + $0x10] sm:$0xff]
    %v25 = vld [vmem:[%s1 + $0x18] sm:$0xff]
    %v26 = vld [vmem:[%s1 + $0x20] sm:$0xff]
    %v27 = vld [vmem:[%s1 + $0x28] sm:$0xff]
    %v28 = vld [vmem:[%s1 + $0x30] sm:$0xff]
    %v29 = vld [vmem:[%s1 + $0x38] sm:$0xff]
    %v30 = vld [vmem:[%s1 + $0x40] sm:$0xff]
    %v31 = vld [vmem:[%s1 + $0x48] sm:$0xff]
    %v32 = vld [vmem:[%s1 + $0x50] sm:$0xff]
    %v33 = vld [vmem:[%s1 + $0x58] sm:$0xff]
    %v34 = vld [vmem:[%s1 + $0x60] sm:$0xff]
    %v35 = vld [vmem:[%s1 + $0x68] sm:$0xff]
    %v36 = vld [vmem:[%s1 + $0x70] sm:$0xff]
    %v37 = vld [vmem:[%s1 + $0x78] sm:$0xff]
    %s38 = scalar_lea.vmem %s1, 128
    %v39 = vld [vmem:[%s38] sm:$0xff]
    %v40 = vld [vmem:[%s38 + $0x8] sm:$0xff]
    %v41 = vld [vmem:[%s38 + $0x10] sm:$0xff]
    %v42 = vld [vmem:[%s38 + $0x18] sm:$0xff]
    %v43 = vld [vmem:[%s38 + $0x20] sm:$0xff]
    %v44 = vld [vmem:[%s38 + $0x28] sm:$0xff]
    %v45 = vld [vmem:[%s38 + $0x30] sm:$0xff]
    %v46 = vld [vmem:[%s38 + $0x38] sm:$0xff]
    %v47 = vld [vmem:[%s38 + $0x40] sm:$0xff]
    %v48 = vld [vmem:[%s38 + $0x48] sm:$0xff]
    %v49 = vld [vmem:[%s38 + $0x50] sm:$0xff]
    %v50 = vld [vmem:[%s38 + $0x58] sm:$0xff]
    %v51 = vld [vmem:[%s38 + $0x60] sm:$0xff]
    %v52 = vld [vmem:[%s38 + $0x68] sm:$0xff]
    %v53 = vld [vmem:[%s38 + $0x70] sm:$0xff]
    %v54 = vld [vmem:[%s38 + $0x78] sm:$0xff]
    %s55 = scalar_lea.vmem %s1, 256
    %v56 = vld [vmem:[%s55] sm:$0xff]
    %v57 = vld [vmem:[%s55 + $0x8] sm:$0xff]
    %v58 = vld [vmem:[%s55 + $0x10] sm:$0xff]
    %v59 = vld [vmem:[%s55 + $0x18] sm:$0xff]
    %v60 = vld [vmem:[%s55 + $0x20] sm:$0xff]
    %v61 = vld [vmem:[%s55 + $0x28] sm:$0xff]
    %v62 = vld [vmem:[%s55 + $0x30] sm:$0xff]
    %v63 = vld [vmem:[%s55 + $0x38] sm:$0xff]
    %v64 = vld [vmem:[%s55 + $0x40] sm:$0xff]
    %v65 = vld [vmem:[%s55 + $0x48] sm:$0xff]
    %v66 = vld [vmem:[%s55 + $0x50] sm:$0xff]
    %v67 = vld [vmem:[%s55 + $0x58] sm:$0xff]
    %v68 = vld [vmem:[%s55 + $0x60] sm:$0xff]
    %v69 = vld [vmem:[%s55 + $0x68] sm:$0xff]
    %v70 = vld [vmem:[%s55 + $0x70] sm:$0xff]
    %v71 = vld [vmem:[%s55 + $0x78] sm:$0xff]
    %s72 = scalar_lea.vmem %s1, 384
    %v73 = vld [vmem:[%s72] sm:$0xff]
    %v74 = vld [vmem:[%s72 + $0x8] sm:$0xff]
    %v75 = vld [vmem:[%s72 + $0x10] sm:$0xff]
    %v76 = vld [vmem:[%s72 + $0x18] sm:$0xff]
    %v77 = vld [vmem:[%s72 + $0x20] sm:$0xff]
    %v78 = vld [vmem:[%s72 + $0x28] sm:$0xff]
    %v79 = vld [vmem:[%s72 + $0x30] sm:$0xff]
    %v80 = vld [vmem:[%s72 + $0x38] sm:$0xff]
    %v81 = vld [vmem:[%s72 + $0x40] sm:$0xff]
    %v82 = vld [vmem:[%s72 + $0x48] sm:$0xff]
    %v83 = vld [vmem:[%s72 + $0x50] sm:$0xff]
    %v84 = vld [vmem:[%s72 + $0x58] sm:$0xff]
    %v85 = vld [vmem:[%s72 + $0x60] sm:$0xff]
    %v86 = vld [vmem:[%s72 + $0x68] sm:$0xff]
    %v87 = vld [vmem:[%s72 + $0x70] sm:$0xff]
    %v88 = vld [vmem:[%s72 + $0x78] sm:$0xff]
    %v89 = vld [vmem:[%s2] sm:$0xf]
    %v90 = vld [vmem:[%s2 + $0x4] sm:$0xf]
    %v91 = vld [vmem:[%s2 + $0x8] sm:$0xf]
    %v92 = vld [vmem:[%s2 + $0xc] sm:$0xf]
    %v93 = vld [vmem:[%s2 + $0x10] sm:$0xf]
    %v94 = vld [vmem:[%s2 + $0x14] sm:$0xf]
    %v95 = vld [vmem:[%s2 + $0x18] sm:$0xf]
    %v96 = vld [vmem:[%s2 + $0x1c] sm:$0xf]
    %v97 = vld [vmem:[%s2 + $0x20] sm:$0xf]
    %v98 = vld [vmem:[%s2 + $0x24] sm:$0xf]
    %v99 = vld [vmem:[%s2 + $0x28] sm:$0xf]
    %v100 = vld [vmem:[%s2 + $0x2c] sm:$0xf]
    %v101 = vld [vmem:[%s2 + $0x30] sm:$0xf]
    %v102 = vld [vmem:[%s2 + $0x34] sm:$0xf]
    %v103 = vld [vmem:[%s2 + $0x38] sm:$0xf]
    %v104 = vld [vmem:[%s2 + $0x3c] sm:$0xf]
    %s105 = scalar_lea.vmem %s2, 64
    %v106 = vld [vmem:[%s105] sm:$0xf]
    %v107 = vld [vmem:[%s105 + $0x4] sm:$0xf]
    %v108 = vld [vmem:[%s105 + $0x8] sm:$0xf]
    %v109 = vld [vmem:[%s105 + $0xc] sm:$0xf]
    %v110 = vld [vmem:[%s105 + $0x10] sm:$0xf]
    %v111 = vld [vmem:[%s105 + $0x14] sm:$0xf]
    %v112 = vld [vmem:[%s105 + $0x18] sm:$0xf]
    %v113 = vld [vmem:[%s105 + $0x1c] sm:$0xf]
    %v114 = vld [vmem:[%s105 + $0x20] sm:$0xf]
    %v115 = vld [vmem:[%s105 + $0x24] sm:$0xf]
    %v116 = vld [vmem:[%s105 + $0x28] sm:$0xf]
    %v117 = vld [vmem:[%s105 + $0x2c] sm:$0xf]
    %v118 = vld [vmem:[%s105 + $0x30] sm:$0xf]
    %v119 = vld [vmem:[%s105 + $0x34] sm:$0xf]
    %v120 = vld [vmem:[%s105 + $0x38] sm:$0xf]
    %v121 = vld [vmem:[%s105 + $0x3c] sm:$0xf]
    %v122 = vld [vmem:[%s3] sm:$0x1]
    %s123 = sld [smem:[#allocation2]]
    %v124 = vld [vmem:[%s0] sm:$0x1]
    %126 = vset.pattern.permute.xlu0 0
    %127 = vperm.xlu0 %126, %v22
    %v128 = vpop.permute.xlu0 %127
    %131 = vset.pattern.permute.xlu0 0
    %132 = vperm.xlu0 %131, %v23
    %v133 = vpop.permute.xlu0 %132
    %136 = vset.pattern.permute.xlu0 0
    %137 = vperm.xlu0 %136, %v24
    %v138 = vpop.permute.xlu0 %137
    %141 = vset.pattern.permute.xlu0 0
    %142 = vperm.xlu0 %141, %v25
    %v143 = vpop.permute.xlu0 %142
    %146 = vset.pattern.permute.xlu0 0
    %147 = vperm.xlu0 %146, %v26
    %v148 = vpop.permute.xlu0 %147
    %151 = vset.pattern.permute.xlu0 0
    %152 = vperm.xlu0 %151, %v27
    %v153 = vpop.permute.xlu0 %152
    %156 = vset.pattern.permute.xlu0 0
    %157 = vperm.xlu0 %156, %v28
    %v158 = vpop.permute.xlu0 %157
    %161 = vset.pattern.permute.xlu0 0
    %162 = vperm.xlu0 %161, %v29
    %v163 = vpop.permute.xlu0 %162
    %166 = vset.pattern.permute.xlu0 0
    %167 = vperm.xlu0 %166, %v30
    %v168 = vpop.permute.xlu0 %167
    %171 = vset.pattern.permute.xlu0 0
    %172 = vperm.xlu0 %171, %v31
    %v173 = vpop.permute.xlu0 %172
    %176 = vset.pattern.permute.xlu0 0
    %177 = vperm.xlu0 %176, %v32
    %v178 = vpop.permute.xlu0 %177
    %181 = vset.pattern.permute.xlu0 0
    %182 = vperm.xlu0 %181, %v33
    %v183 = vpop.permute.xlu0 %182
    %186 = vset.pattern.permute.xlu0 0
    %187 = vperm.xlu0 %186, %v34
    %v188 = vpop.permute.xlu0 %187
    %191 = vset.pattern.permute.xlu0 0
    %192 = vperm.xlu0 %191, %v35
    %v193 = vpop.permute.xlu0 %192
    %196 = vset.pattern.permute.xlu0 0
    %197 = vperm.xlu0 %196, %v36
    %v198 = vpop.permute.xlu0 %197
    %201 = vset.pattern.permute.xlu0 0
    %202 = vperm.xlu0 %201, %v37
    %v203 = vpop.permute.xlu0 %202
    %v206 = vperm.slane %v124, 0
    %v208 = vmul.f32 %v128, %v206
    %v209 = vmul.f32 %v133, %v206
    %v210 = vmul.f32 %v138, %v206
    %v211 = vmul.f32 %v143, %v206
    %v212 = vmul.f32 %v148, %v206
    %v213 = vmul.f32 %v153, %v206
    %v214 = vmul.f32 %v158, %v206
    %v215 = vmul.f32 %v163, %v206
    %v216 = vmul.f32 %v168, %v206
    %v217 = vmul.f32 %v173, %v206
    %v218 = vmul.f32 %v178, %v206
    %v219 = vmul.f32 %v183, %v206
    %v220 = vmul.f32 %v188, %v206
    %v221 = vmul.f32 %v193, %v206
    %v222 = vmul.f32 %v198, %v206
    %v223 = vmul.f32 %v203, %v206
    %225 = vset.pattern.permute.xlu0 0
    %226 = vperm.xlu0 %225, %v39
    %v227 = vpop.permute.xlu0 %226
    %230 = vset.pattern.permute.xlu0 0
    %231 = vperm.xlu0 %230, %v40
    %v232 = vpop.permute.xlu0 %231
    %235 = vset.pattern.permute.xlu0 0
    %236 = vperm.xlu0 %235, %v41
    %v237 = vpop.permute.xlu0 %236
    %240 = vset.pattern.permute.xlu0 0
    %241 = vperm.xlu0 %240, %v42
    %v242 = vpop.permute.xlu0 %241
    %245 = vset.pattern.permute.xlu0 0
    %246 = vperm.xlu0 %245, %v43
    %v247 = vpop.permute.xlu0 %246
    %250 = vset.pattern.permute.xlu0 0
    %251 = vperm.xlu0 %250, %v44
    %v252 = vpop.permute.xlu0 %251
    %255 = vset.pattern.permute.xlu0 0
    %256 = vperm.xlu0 %255, %v45
    %v257 = vpop.permute.xlu0 %256
    %260 = vset.pattern.permute.xlu0 0
    %261 = vperm.xlu0 %260, %v46
    %v262 = vpop.permute.xlu0 %261
    %265 = vset.pattern.permute.xlu0 0
    %266 = vperm.xlu0 %265, %v47
    %v267 = vpop.permute.xlu0 %266
    %270 = vset.pattern.permute.xlu0 0
    %271 = vperm.xlu0 %270, %v48
    %v272 = vpop.permute.xlu0 %271
    %275 = vset.pattern.permute.xlu0 0
    %276 = vperm.xlu0 %275, %v49
    %v277 = vpop.permute.xlu0 %276
    %280 = vset.pattern.permute.xlu0 0
    %281 = vperm.xlu0 %280, %v50
    %v282 = vpop.permute.xlu0 %281
    %285 = vset.pattern.permute.xlu0 0
    %286 = vperm.xlu0 %285, %v51
    %v287 = vpop.permute.xlu0 %286
    %290 = vset.pattern.permute.xlu0 0
    %291 = vperm.xlu0 %290, %v52
    %v292 = vpop.permute.xlu0 %291
    %295 = vset.pattern.permute.xlu0 0
    %296 = vperm.xlu0 %295, %v53
    %v297 = vpop.permute.xlu0 %296
    %300 = vset.pattern.permute.xlu0 0
    %301 = vperm.xlu0 %300, %v54
    %v302 = vpop.permute.xlu0 %301
    %v304 = vadd.f32 %v208, %v227
    %v305 = vadd.f32 %v209, %v232
    %v306 = vadd.f32 %v210, %v237
    %v307 = vadd.f32 %v211, %v242
    %v308 = vadd.f32 %v212, %v247
    %v309 = vadd.f32 %v213, %v252
    %v310 = vadd.f32 %v214, %v257
    %v311 = vadd.f32 %v215, %v262
    %v312 = vadd.f32 %v216, %v267
    %v313 = vadd.f32 %v217, %v272
    %v314 = vadd.f32 %v218, %v277
    %v315 = vadd.f32 %v219, %v282
    %v316 = vadd.f32 %v220, %v287
    %v317 = vadd.f32 %v221, %v292
    %v318 = vadd.f32 %v222, %v297
    %v319 = vadd.f32 %v223, %v302
    %v320 = vmax.f32 %v304, 0.0
    %v321 = vmax.f32 %v305, 0.0
    %v322 = vmax.f32 %v306, 0.0
    %v323 = vmax.f32 %v307, 0.0
    %v324 = vmax.f32 %v308, 0.0
    %v325 = vmax.f32 %v309, 0.0
    %v326 = vmax.f32 %v310, 0.0
    %v327 = vmax.f32 %v311, 0.0
    %v328 = vmax.f32 %v312, 0.0
    %v329 = vmax.f32 %v313, 0.0
    %v330 = vmax.f32 %v314, 0.0
    %v331 = vmax.f32 %v315, 0.0
    %v332 = vmax.f32 %v316, 0.0
    %v333 = vmax.f32 %v317, 0.0
    %v334 = vmax.f32 %v318, 0.0
    %v335 = vmax.f32 %v319, 0.0
    %v336 = vpack.c.bf16 %v321, %v320
    %v337 = vpack.c.bf16 %v323, %v322
    %v338 = vpack.c.bf16 %v325, %v324
    %v339 = vpack.c.bf16 %v327, %v326
    %v340 = vpack.c.bf16 %v329, %v328
    %v341 = vpack.c.bf16 %v331, %v330
    %v342 = vpack.c.bf16 %v333, %v332
    %v343 = vpack.c.bf16 %v335, %v334
    %345 = vset.pattern.permute.xlu0 0
    %346 = vperm.xlu0 %345, %v56
    %v347 = vpop.permute.xlu0 %346
    %350 = vset.pattern.permute.xlu0 0
    %351 = vperm.xlu0 %350, %v57
    %v352 = vpop.permute.xlu0 %351
    %355 = vset.pattern.permute.xlu0 0
    %356 = vperm.xlu0 %355, %v58
    %v357 = vpop.permute.xlu0 %356
    %360 = vset.pattern.permute.xlu0 0
    %361 = vperm.xlu0 %360, %v59
    %v362 = vpop.permute.xlu0 %361
    %365 = vset.pattern.permute.xlu0 0
    %366 = vperm.xlu0 %365, %v60
    %v367 = vpop.permute.xlu0 %366
    %370 = vset.pattern.permute.xlu0 0
    %371 = vperm.xlu0 %370, %v61
    %v372 = vpop.permute.xlu0 %371
    %375 = vset.pattern.permute.xlu0 0
    %376 = vperm.xlu0 %375, %v62
    %v377 = vpop.permute.xlu0 %376
    %380 = vset.pattern.permute.xlu0 0
    %381 = vperm.xlu0 %380, %v63
    %v382 = vpop.permute.xlu0 %381
    %385 = vset.pattern.permute.xlu0 0
    %386 = vperm.xlu0 %385, %v64
    %v387 = vpop.permute.xlu0 %386
    %390 = vset.pattern.permute.xlu0 0
    %391 = vperm.xlu0 %390, %v65
    %v392 = vpop.permute.xlu0 %391
    %395 = vset.pattern.permute.xlu0 0
    %396 = vperm.xlu0 %395, %v66
    %v397 = vpop.permute.xlu0 %396
    %400 = vset.pattern.permute.xlu0 0
    %401 = vperm.xlu0 %400, %v67
    %v402 = vpop.permute.xlu0 %401
    %405 = vset.pattern.permute.xlu0 0
    %406 = vperm.xlu0 %405, %v68
    %v407 = vpop.permute.xlu0 %406
    %410 = vset.pattern.permute.xlu0 0
    %411 = vperm.xlu0 %410, %v69
    %v412 = vpop.permute.xlu0 %411
    %415 = vset.pattern.permute.xlu0 0
    %416 = vperm.xlu0 %415, %v70
    %v417 = vpop.permute.xlu0 %416
    %420 = vset.pattern.permute.xlu0 0
    %421 = vperm.xlu0 %420, %v71
    %v422 = vpop.permute.xlu0 %421
    %v440 = vunpack.c.l.b16 %v89
    %v441 = vunpack.c.l.b16 %v90
    %v442 = vunpack.c.l.b16 %v91
    %v443 = vunpack.c.l.b16 %v92
    %v444 = vunpack.c.l.b16 %v93
    %v445 = vunpack.c.l.b16 %v94
    %v446 = vunpack.c.l.b16 %v95
    %v447 = vunpack.c.l.b16 %v96
    %v448 = vunpack.c.l.b16 %v97
    %v449 = vunpack.c.l.b16 %v98
    %v450 = vunpack.c.l.b16 %v99
    %v451 = vunpack.c.l.b16 %v100
    %v452 = vunpack.c.l.b16 %v101
    %v453 = vunpack.c.l.b16 %v102
    %v454 = vunpack.c.l.b16 %v103
    %v455 = vunpack.c.l.b16 %v104
    %v456 = vpack.c.b16 %v441, %v440
    %v457 = vpack.c.b16 %v443, %v442
    %v458 = vpack.c.b16 %v445, %v444
    %v459 = vpack.c.b16 %v447, %v446
    %v460 = vpack.c.b16 %v449, %v448
    %v461 = vpack.c.b16 %v451, %v450
    %v462 = vpack.c.b16 %v453, %v452
    %v463 = vpack.c.b16 %v455, %v454
    %472 = vmatpush.bf16.msra.mxu0 %v343
    %473 = vmatpush.bf16.msra.mxu0 %v342
    %474 = vmatpush.bf16.msra.mxu0 %v341
    %475 = vmatpush.bf16.msra.mxu0 %v340
    %476 = vmatpush.bf16.msra.mxu0 %v339
    %477 = vmatpush.bf16.msra.mxu0 %v338
    %478 = vmatpush.bf16.msra.mxu0 %v337
    %479 = vmatpush.bf16.msra.mxu0 %v336
    %480 = vmatmul.bf16.gmra.mxu0 %v456
    %v481 = vpop.f32.mrf.mxu0
    %v482 = vadd.f32 %v347, %v481
    %v483 = vpop.f32.mrf.mxu0
    %v484 = vadd.f32 %v352, %v483
    %485 = vmatmul.bf16.gmra.mxu0 %v457
    %v486 = vpop.f32.mrf.mxu0
    %v487 = vadd.f32 %v357, %v486
    %v488 = vpop.f32.mrf.mxu0
    %v489 = vadd.f32 %v362, %v488
    %490 = vmatmul.bf16.gmra.mxu0 %v458
    %v491 = vpop.f32.mrf.mxu0
    %v492 = vadd.f32 %v367, %v491
    %v493 = vpop.f32.mrf.mxu0
    %v494 = vadd.f32 %v372, %v493
    %495 = vmatmul.bf16.gmra.mxu0 %v459
    %v496 = vpop.f32.mrf.mxu0
    %v497 = vadd.f32 %v377, %v496
    %v498 = vpop.f32.mrf.mxu0
    %v499 = vadd.f32 %v382, %v498
    %500 = vmatmul.bf16.gmra.mxu0 %v460
    %v501 = vpop.f32.mrf.mxu0
    %v502 = vadd.f32 %v387, %v501
    %v503 = vpop.f32.mrf.mxu0
    %v504 = vadd.f32 %v392, %v503
    %505 = vmatmul.bf16.gmra.mxu0 %v461
    %v506 = vpop.f32.mrf.mxu0
    %v507 = vadd.f32 %v397, %v506
    %v508 = vpop.f32.mrf.mxu0
    %v509 = vadd.f32 %v402, %v508
    %510 = vmatmul.bf16.gmra.mxu0 %v462
    %v511 = vpop.f32.mrf.mxu0
    %v512 = vadd.f32 %v407, %v511
    %v513 = vpop.f32.mrf.mxu0
    %v514 = vadd.f32 %v412, %v513
    %515 = vmatmul.bf16.gmra.mxu0 %v463
    %v516 = vpop.f32.mrf.mxu0
    %v517 = vadd.f32 %v417, %v516
    %v518 = vpop.f32.mrf.mxu0
    %v519 = vadd.f32 %v422, %v518
    %520 = vdwg.mxu0
    %v521 = vmax.f32 %v482, 0.0
    %v522 = vmax.f32 %v484, 0.0
    %v523 = vmax.f32 %v487, 0.0
    %v524 = vmax.f32 %v489, 0.0
    %v525 = vmax.f32 %v492, 0.0
    %v526 = vmax.f32 %v494, 0.0
    %v527 = vmax.f32 %v497, 0.0
    %v528 = vmax.f32 %v499, 0.0
    %v529 = vmax.f32 %v502, 0.0
    %v530 = vmax.f32 %v504, 0.0
    %v531 = vmax.f32 %v507, 0.0
    %v532 = vmax.f32 %v509, 0.0
    %v533 = vmax.f32 %v512, 0.0
    %v534 = vmax.f32 %v514, 0.0
    %v535 = vmax.f32 %v517, 0.0
    %v536 = vmax.f32 %v519, 0.0
    %v537 = vpack.c.bf16 %v522, %v521
    %v538 = vpack.c.bf16 %v524, %v523
    %v539 = vpack.c.bf16 %v526, %v525
    %v540 = vpack.c.bf16 %v528, %v527
    %v541 = vpack.c.bf16 %v530, %v529
    %v542 = vpack.c.bf16 %v532, %v531
    %v543 = vpack.c.bf16 %v534, %v533
    %v544 = vpack.c.bf16 %v536, %v535
    %546 = vset.pattern.permute.xlu0 0
    %547 = vperm.xlu0 %546, %v73
    %v548 = vpop.permute.xlu0 %547
    %551 = vset.pattern.permute.xlu0 0
    %552 = vperm.xlu0 %551, %v74
    %v553 = vpop.permute.xlu0 %552
    %556 = vset.pattern.permute.xlu0 0
    %557 = vperm.xlu0 %556, %v75
    %v558 = vpop.permute.xlu0 %557
    %561 = vset.pattern.permute.xlu0 0
    %562 = vperm.xlu0 %561, %v76
    %v563 = vpop.permute.xlu0 %562
    %566 = vset.pattern.permute.xlu0 0
    %567 = vperm.xlu0 %566, %v77
    %v568 = vpop.permute.xlu0 %567
    %571 = vset.pattern.permute.xlu0 0
    %572 = vperm.xlu0 %571, %v78
    %v573 = vpop.permute.xlu0 %572
    %576 = vset.pattern.permute.xlu0 0
    %577 = vperm.xlu0 %576, %v79
    %v578 = vpop.permute.xlu0 %577
    %581 = vset.pattern.permute.xlu0 0
    %582 = vperm.xlu0 %581, %v80
    %v583 = vpop.permute.xlu0 %582
    %586 = vset.pattern.permute.xlu0 0
    %587 = vperm.xlu0 %586, %v81
    %v588 = vpop.permute.xlu0 %587
    %591 = vset.pattern.permute.xlu0 0
    %592 = vperm.xlu0 %591, %v82
    %v593 = vpop.permute.xlu0 %592
    %596 = vset.pattern.permute.xlu0 0
    %597 = vperm.xlu0 %596, %v83
    %v598 = vpop.permute.xlu0 %597
    %601 = vset.pattern.permute.xlu0 0
    %602 = vperm.xlu0 %601, %v84
    %v603 = vpop.permute.xlu0 %602
    %606 = vset.pattern.permute.xlu0 0
    %607 = vperm.xlu0 %606, %v85
    %v608 = vpop.permute.xlu0 %607
    %611 = vset.pattern.permute.xlu0 0
    %612 = vperm.xlu0 %611, %v86
    %v613 = vpop.permute.xlu0 %612
    %616 = vset.pattern.permute.xlu0 0
    %617 = vperm.xlu0 %616, %v87
    %v618 = vpop.permute.xlu0 %617
    %621 = vset.pattern.permute.xlu0 0
    %622 = vperm.xlu0 %621, %v88
    %v623 = vpop.permute.xlu0 %622
    %v641 = vunpack.c.l.b16 %v106
    %v642 = vunpack.c.l.b16 %v107
    %v643 = vunpack.c.l.b16 %v108
    %v644 = vunpack.c.l.b16 %v109
    %v645 = vunpack.c.l.b16 %v110
    %v646 = vunpack.c.l.b16 %v111
    %v647 = vunpack.c.l.b16 %v112
    %v648 = vunpack.c.l.b16 %v113
    %v649 = vunpack.c.l.b16 %v114
    %v650 = vunpack.c.l.b16 %v115
    %v651 = vunpack.c.l.b16 %v116
    %v652 = vunpack.c.l.b16 %v117
    %v653 = vunpack.c.l.b16 %v118
    %v654 = vunpack.c.l.b16 %v119
    %v655 = vunpack.c.l.b16 %v120
    %v656 = vunpack.c.l.b16 %v121
    %v657 = vpack.c.b16 %v642, %v641
    %v658 = vpack.c.b16 %v644, %v643
    %v659 = vpack.c.b16 %v646, %v645
    %v660 = vpack.c.b16 %v648, %v647
    %v661 = vpack.c.b16 %v650, %v649
    %v662 = vpack.c.b16 %v652, %v651
    %v663 = vpack.c.b16 %v654, %v653
    %v664 = vpack.c.b16 %v656, %v655
    %673 = vmatpush.bf16.msra.mxu0 %v544
    %674 = vmatpush.bf16.msra.mxu0 %v543
    %675 = vmatpush.bf16.msra.mxu0 %v542
    %676 = vmatpush.bf16.msra.mxu0 %v541
    %677 = vmatpush.bf16.msra.mxu0 %v540
    %678 = vmatpush.bf16.msra.mxu0 %v539
    %679 = vmatpush.bf16.msra.mxu0 %v538
    %680 = vmatpush.bf16.msra.mxu0 %v537
    %681 = vmatmul.bf16.gmra.mxu0 %v657
    %v682 = vpop.f32.mrf.mxu0
    %v683 = vadd.f32 %v548, %v682
    %v684 = vpop.f32.mrf.mxu0
    %v685 = vadd.f32 %v553, %v684
    %686 = vmatmul.bf16.gmra.mxu0 %v658
    %v687 = vpop.f32.mrf.mxu0
    %v688 = vadd.f32 %v558, %v687
    %v689 = vpop.f32.mrf.mxu0
    %v690 = vadd.f32 %v563, %v689
    %691 = vmatmul.bf16.gmra.mxu0 %v659
    %v692 = vpop.f32.mrf.mxu0
    %v693 = vadd.f32 %v568, %v692
    %v694 = vpop.f32.mrf.mxu0
    %v695 = vadd.f32 %v573, %v694
    %696 = vmatmul.bf16.gmra.mxu0 %v660
    %v697 = vpop.f32.mrf.mxu0
    %v698 = vadd.f32 %v578, %v697
    %v699 = vpop.f32.mrf.mxu0
    %v700 = vadd.f32 %v583, %v699
    %701 = vmatmul.bf16.gmra.mxu0 %v661
    %v702 = vpop.f32.mrf.mxu0
    %v703 = vadd.f32 %v588, %v702
    %v704 = vpop.f32.mrf.mxu0
    %v705 = vadd.f32 %v593, %v704
    %706 = vmatmul.bf16.gmra.mxu0 %v662
    %v707 = vpop.f32.mrf.mxu0
    %v708 = vadd.f32 %v598, %v707
    %v709 = vpop.f32.mrf.mxu0
    %v710 = vadd.f32 %v603, %v709
    %711 = vmatmul.bf16.gmra.mxu0 %v663
    %v712 = vpop.f32.mrf.mxu0
    %v713 = vadd.f32 %v608, %v712
    %v714 = vpop.f32.mrf.mxu0
    %v715 = vadd.f32 %v613, %v714
    %716 = vmatmul.bf16.gmra.mxu0 %v664
    %v717 = vpop.f32.mrf.mxu0
    %v718 = vadd.f32 %v618, %v717
    %v719 = vpop.f32.mrf.mxu0
    %v720 = vadd.f32 %v623, %v719
    %721 = vdwg.mxu0
    %v722 = vmax.f32 %v683, 0.0
    %v723 = vmax.f32 %v685, 0.0
    %v724 = vmax.f32 %v688, 0.0
    %v725 = vmax.f32 %v690, 0.0
    %v726 = vmax.f32 %v693, 0.0
    %v727 = vmax.f32 %v695, 0.0
    %v728 = vmax.f32 %v698, 0.0
    %v729 = vmax.f32 %v700, 0.0
    %v730 = vmax.f32 %v703, 0.0
    %v731 = vmax.f32 %v705, 0.0
    %v732 = vmax.f32 %v708, 0.0
    %v733 = vmax.f32 %v710, 0.0
    %v734 = vmax.f32 %v713, 0.0
    %v735 = vmax.f32 %v715, 0.0
    %v736 = vmax.f32 %v718, 0.0
    %v737 = vmax.f32 %v720, 0.0
    %v738 = vpack.c.bf16 %v723, %v722
    %v739 = vpack.c.bf16 %v725, %v724
    %v740 = vpack.c.bf16 %v727, %v726
    %v741 = vpack.c.bf16 %v729, %v728
    %v742 = vpack.c.bf16 %v731, %v730
    %v743 = vpack.c.bf16 %v733, %v732
    %v744 = vpack.c.bf16 %v735, %v734
    %v745 = vpack.c.bf16 %v737, %v736
    %v746 = vstv %s123
    %747 = vmatpush.bf16.msra.mxu0 %v745
    %748 = vmatpush.bf16.msra.mxu0 %v744
    %749 = vmatpush.bf16.msra.mxu0 %v743
    %750 = vmatpush.bf16.msra.mxu0 %v742
    %751 = vmatpush.bf16.msra.mxu0 %v741
    %752 = vmatpush.bf16.msra.mxu0 %v740
    %753 = vmatpush.bf16.msra.mxu0 %v739
    %754 = vmatpush.bf16.msra.mxu0 %v738
    %755 = vmatmul.bf16.gmra.mxu0 %v122
    %v756 = vpop.f32.mrf.mxu0
    %v757 = vadd.f32 %v746, %v756
    %v758 = vpop.f32.mrf.mxu0
    %759 = vdwg.mxu0
    %760 = vst [vmem:[#allocation3] sm:$0x1] %v757
    // Predicated region
    $region22: #{tpu_custom_call.1} parent=1 // pred_check
      _
    $region23: #{tpu_custom_call.1} parent=1 // pred_check_branch
      %762 = sbr.rel (0) target = $region25
    $region24: #{tpu_custom_call.1} parent=1 // pred_region
      %764 = vsyncadd [#allocation4], 0
      %s766 = sshll.u32 [#allocation3], 4
      %s767 = int_to_ptr.vmem [resolvable:$true] %s766
      %s768 = sshll.u32 %s5, 4
      %s769 = int_to_ptr.hbm [resolvable:$true] %s768
      %771 = dma.vmem_to_hbm [thread:$0]  %s767, 16, %s769, [#allocation4]
    $region25: #{tpu_custom_call.1} parent=1 // pred_fallthru
      _
    // Predicated region
    $region26: #{tpu_custom_call.1} parent=1 // pred_check
      _
    $region27: #{tpu_custom_call.1} parent=1 // pred_check_branch
      %773 = sbr.rel (0) target = $region29
    $region28: #{tpu_custom_call.1} parent=1 // pred_region
      %775 = dma.done [#allocation4], 16
    $region29: #{tpu_custom_call.1} parent=1 // pred_fallthru
      _
    %776 = vsyncpa [#allocation4], 1

</llo_original>
